<compile_context>
chip_gen: v5e
topology: v5e:2x2
jax: 0.10.0
libtpu: 0.0.40
codegen_flags: <defaults>
</compile_context>

<pallas_src>
import jax
import jax.numpy as jnp
from jax.experimental import pallas as pl
from jax.experimental.pallas import tpu as pltpu

LN_EPS = 1e-5  # torch.nn.LayerNorm default


def _choose_tile_t(T, D, vmem_budget_bytes=24 * 1024 * 1024):
    """Largest multiple-of-8 T-tile whose double-buffered f32 in+out tiles fit the budget."""
    # 2x double-buffered input tile + 2x output tile, f32 worst case: 16 * tile_t * D bytes
    cap = max(8, vmem_budget_bytes // (16 * max(D, 1)))
    target = min(1024, cap)
    target = max(8, (target // 8) * 8)
    if T <= target:
        return T                      # full sequence fits -> block dim equals array dim
    t = target
    while t >= 8:
        if T % t == 0:
            return t
        t -= 8
    return T                          # no multiple-of-8 divisor; fall back to whole T


def stylization_kernel(scale_ref, shift_ref, h_ref, gamma_ref, beta_ref,
                       w_out_ref, b_out_ref, o_ref):
    # Block shapes: scale/shift (1,1,D); h/o (1,TILE_T,D); gamma/beta/b_out (1,D); w_out (D,D) bf16
    h = h_ref[0].astype(jnp.float32)                       # (TILE_T, D)

    # --- LayerNorm over last dim (f32) ---
    mean = jnp.mean(h, axis=-1, keepdims=True)
    cent = h - mean
    var = jnp.mean(cent * cent, axis=-1, keepdims=True)
    ln = cent * jax.lax.rsqrt(var + LN_EPS)
    ln = ln * gamma_ref[...].astype(jnp.float32) + beta_ref[...].astype(jnp.float32)

    # --- stylization: scale & shift broadcast over the sequence tile ---
    scale = scale_ref[0].astype(jnp.float32)               # (1, D)
    shift = shift_ref[0].astype(jnp.float32)               # (1, D)
    y = ln * (1.0 + scale) + shift                         # (TILE_T, D)

    # --- out_layers: SiLU -> Dropout(identity in eval) -> Linear(D, D) ---
    y = y * jax.nn.sigmoid(y)                              # SiLU in f32 (VPU/EUP)
    out = jnp.dot(y.astype(jnp.bfloat16), w_out_ref[...],  # bf16 operands, f32 accumulate
                  preferred_element_type=jnp.float32)
    out = out + b_out_ref[...].astype(jnp.float32)

    o_ref[0] = out.astype(o_ref.dtype)


def stylization_block(h, emb, params):
    """h: (B, T, D); emb: (B, E); params: dict of weights (pre-transposed for x @ W)."""
    B, T, D = h.shape

    # --- emb branch hoisted to XLA: SiLU -> Linear(E, 2D) -> chunk into scale/shift ---
    # A (B, E) @ (E, 2D) matmul is <1% MXU utilization in-kernel and would otherwise be
    # recomputed for every sequence tile; XLA handles it once per call.
    e = emb.astype(jnp.float32)
    e = e * jax.nn.sigmoid(e)
    emb_out = e @ params["w_emb"].astype(jnp.float32) + params["b_emb"].astype(jnp.float32)
    scale = emb_out[:, :D].reshape(B, 1, D)                # (B, 1, D)
    shift = emb_out[:, D:].reshape(B, 1, D)                # (B, 1, D)

    # bf16 weights for the in-kernel matmul (halves resident VMEM + HBM traffic).
    w_out_bf16 = params["w_out"].astype(jnp.bfloat16)

    tile_t = _choose_tile_t(T, D)
    num_t = T // tile_t

    itemsize = jnp.dtype(h.dtype).itemsize
    cost = pl.CostEstimate(
        flops=2 * B * T * D * D,
        transcendentals=B * T * D,                         # in-kernel sigmoid (SiLU)
        bytes_accessed=int(2 * B * T * D * itemsize        # h in + out
                           + 2 * B * D * 4                 # scale + shift
                           + D * D * 2                     # bf16 W_out
                           + 3 * D * 4),                   # gamma, beta, b_out
    )

    return pl.pallas_call(
        stylization_kernel,
        out_shape=jax.ShapeDtypeStruct((B, T, D), h.dtype),
        grid=(B, num_t),
        in_specs=[
            pl.BlockSpec((1, 1, D), lambda b, t: (b, 0, 0)),          # scale
            pl.BlockSpec((1, 1, D), lambda b, t: (b, 0, 0)),          # shift
            pl.BlockSpec((1, tile_t, D), lambda b, t: (b, t, 0)),     # h tile
            pl.BlockSpec((1, D), lambda b, t: (0, 0)),                # LN gamma
            pl.BlockSpec((1, D), lambda b, t: (0, 0)),                # LN beta
            pl.BlockSpec((D, D), lambda b, t: (0, 0)),                # W_out (bf16, resident)
            pl.BlockSpec((1, D), lambda b, t: (0, 0)),                # b_out
        ],
        out_specs=pl.BlockSpec((1, tile_t, D), lambda b, t: (b, t, 0)),
        compiler_params=pltpu.CompilerParams(
            dimension_semantics=("parallel", "parallel")),
        cost_estimate=cost,
    )(scale, shift, h, params["gamma"], params["beta"], w_out_bf16, params["b_out"])


def reference(h, emb, params):
    """Pure-JAX f32 reference of the PyTorch forward (eval mode, dropout = identity)."""
    e = emb * jax.nn.sigmoid(emb)
    emb_out = e @ params["w_emb"] + params["b_emb"]                 # (B, 2D)
    D = params["gamma"].shape[-1]
    scale = emb_out[:, None, :D]
    shift = emb_out[:, None, D:]
    mean = jnp.mean(h, axis=-1, keepdims=True)
    var = jnp.mean((h - mean) ** 2, axis=-1, keepdims=True)
    ln = (h - mean) * jax.lax.rsqrt(var + LN_EPS)
    ln = ln * params["gamma"] + params["beta"]
    y = ln * (1.0 + scale) + shift
    y = y * jax.nn.sigmoid(y)
    return y @ params["w_out"] + params["b_out"]


def make_params(key, latent_dim, time_embed_dim):
    k1, k2, k3, k4 = jax.random.split(key, 4)
    D, E = latent_dim, time_embed_dim
    # Linear weights stored pre-transposed so the kernel computes x @ W + b.
    # Note: PyTorch zero-inits the final Linear (zero_module); small deterministic nonzero
    # values are used here so the kernel's hot path is actually exercised.
    return {
        "w_emb": 0.05 * jax.random.normal(k1, (E, 2 * D), jnp.float32),
        "b_emb": 0.01 * jax.random.normal(k2, (1, 2 * D), jnp.float32),
        "gamma": jnp.ones((1, D), jnp.float32),   # LayerNorm default init
        "beta": jnp.zeros((1, D), jnp.float32),
        "w_out": 0.05 * jax.random.normal(k3, (D, D), jnp.float32),
        "b_out": 0.01 * jax.random.normal(k4, (1, D), jnp.float32),
    }


if __name__ == "__main__":
    B, T, D, E = 2, 8, 32, 16  # batch, seq, latent_dim, time_embed_dim (small test shapes)
    key = jax.random.PRNGKey(0)
    kh, ke, kp = jax.random.split(key, 3)
    h = jax.random.normal(kh, (B, T, D), jnp.float32)
    emb = jax.random.normal(ke, (B, E), jnp.float32)
    params = make_params(kp, D, E)

    out = stylization_block(h, emb, params)
    out = jax.block_until_ready(out)

    ref = reference(h, emb, params)
    assert out.shape == (B, T, D)
    # Loosened tolerance: the kernel's D x D matmul uses bf16 operands (f32 accumulate).
    assert jnp.allclose(out, ref, atol=1e-2, rtol=1e-2), "mismatch vs pure-JAX reference"
    print("KERNEL_OK")
</pallas_src>

<mosaic_0001>
module attributes {stable_mosaic.version = 11 : i64} {
  func.func @stylization_kernel(%arg0: i32, %arg1: i32, %arg2: memref<1x1x32xf32, #tpu.memory_space<vmem>>, %arg3: memref<1x1x32xf32, #tpu.memory_space<vmem>>, %arg4: memref<1x8x32xf32, #tpu.memory_space<vmem>>, %arg5: memref<1x32xf32, #tpu.memory_space<vmem>>, %arg6: memref<1x32xf32, #tpu.memory_space<vmem>>, %arg7: memref<32x32xbf16, #tpu.memory_space<vmem>>, %arg8: memref<1x32xf32, #tpu.memory_space<vmem>>, %arg9: memref<1x8x32xf32, #tpu.memory_space<vmem>>) attributes {dimension_semantics = [#tpu.dimension_semantics<parallel>, #tpu.dimension_semantics<parallel>], iteration_bounds = array<i64: 2, 1>, scalar_prefetch = 0 : i64, scratch_operands = 0 : i64, tpu.core_type = #tpu.core_type<tc>, window_params = [{transform_indices = @transform_0, window_bounds = array<i64: 1, 1, 32>}, {transform_indices = @transform_1, window_bounds = array<i64: 1, 1, 32>}, {transform_indices = @transform_2, window_bounds = array<i64: 1, 8, 32>}, {pipeline_mode = #tpu.pipeline_mode<synchronous>, transform_indices = @transform_3, window_bounds = array<i64: 1, 32>}, {pipeline_mode = #tpu.pipeline_mode<synchronous>, transform_indices = @transform_4, window_bounds = array<i64: 1, 32>}, {pipeline_mode = #tpu.pipeline_mode<synchronous>, transform_indices = @transform_5, window_bounds = array<i64: 32, 32>}, {pipeline_mode = #tpu.pipeline_mode<synchronous>, transform_indices = @transform_6, window_bounds = array<i64: 1, 32>}, {transform_indices = @transform_7, window_bounds = array<i64: 1, 8, 32>}]} {
    %c0 = arith.constant 0 : index
    %c0_0 = arith.constant 0 : index
    %c0_1 = arith.constant 0 : index
    %0 = vector.load %arg4[%c0, %c0_0, %c0_1] : memref<1x8x32xf32, #tpu.memory_space<vmem>>, vector<1x8x32xf32>
    %1 = vector.shape_cast %0 : vector<1x8x32xf32> to vector<8x32xf32>
    %cst = arith.constant dense<0.000000e+00> : vector<8xf32>
    %2 = vector.multi_reduction <add>, %1, %cst [1] : vector<8x32xf32> to vector<8xf32>
    %3 = vector.shape_cast %2 : vector<8xf32> to vector<8x1xf32>
    %cst_2 = arith.constant 3.200000e+01 : f32
    %4 = vector.broadcast %cst_2 : f32 to vector<8x1xf32>
    %5 = arith.divf %3, %4 : vector<8x1xf32>
    %6 = vector.broadcast %5 : vector<8x1xf32> to vector<8x32xf32>
    %7 = arith.subf %1, %6 : vector<8x32xf32>
    %8 = arith.mulf %7, %7 : vector<8x32xf32>
    %cst_3 = arith.constant dense<0.000000e+00> : vector<8xf32>
    %9 = vector.multi_reduction <add>, %8, %cst_3 [1] : vector<8x32xf32> to vector<8xf32>
    %10 = vector.shape_cast %9 : vector<8xf32> to vector<8x1xf32>
    %cst_4 = arith.constant 3.200000e+01 : f32
    %11 = vector.broadcast %cst_4 : f32 to vector<8x1xf32>
    %12 = arith.divf %10, %11 : vector<8x1xf32>
    %cst_5 = arith.constant 9.99999974E-6 : f32
    %13 = vector.broadcast %cst_5 : f32 to vector<8x1xf32>
    %14 = arith.addf %12, %13 : vector<8x1xf32>
    %15 = math.rsqrt %14 : vector<8x1xf32>
    %16 = vector.broadcast %15 : vector<8x1xf32> to vector<8x32xf32>
    %17 = arith.mulf %7, %16 : vector<8x32xf32>
    %c0_6 = arith.constant 0 : index
    %c0_7 = arith.constant 0 : index
    %18 = vector.load %arg5[%c0_6, %c0_7] : memref<1x32xf32, #tpu.memory_space<vmem>>, vector<1x32xf32>
    %19 = vector.broadcast %18 : vector<1x32xf32> to vector<8x32xf32>
    %20 = arith.mulf %17, %19 : vector<8x32xf32>
    %c0_8 = arith.constant 0 : index
    %c0_9 = arith.constant 0 : index
    %21 = vector.load %arg6[%c0_8, %c0_9] : memref<1x32xf32, #tpu.memory_space<vmem>>, vector<1x32xf32>
    %22 = vector.broadcast %21 : vector<1x32xf32> to vector<8x32xf32>
    %23 = arith.addf %20, %22 : vector<8x32xf32>
    %c0_10 = arith.constant 0 : index
    %c0_11 = arith.constant 0 : index
    %c0_12 = arith.constant 0 : index
    %24 = vector.load %arg2[%c0_10, %c0_11, %c0_12] : memref<1x1x32xf32, #tpu.memory_space<vmem>>, vector<1x1x32xf32>
    %25 = vector.shape_cast %24 : vector<1x1x32xf32> to vector<1x32xf32>
    %c0_13 = arith.constant 0 : index
    %c0_14 = arith.constant 0 : index
    %c0_15 = arith.constant 0 : index
    %26 = vector.load %arg3[%c0_13, %c0_14, %c0_15] : memref<1x1x32xf32, #tpu.memory_space<vmem>>, vector<1x1x32xf32>
    %27 = vector.shape_cast %26 : vector<1x1x32xf32> to vector<1x32xf32>
    %cst_16 = arith.constant 1.000000e+00 : f32
    %28 = vector.broadcast %cst_16 : f32 to vector<1x32xf32>
    %29 = arith.addf %28, %25 : vector<1x32xf32>
    %30 = vector.broadcast %29 : vector<1x32xf32> to vector<8x32xf32>
    %31 = arith.mulf %23, %30 : vector<8x32xf32>
    %32 = vector.broadcast %27 : vector<1x32xf32> to vector<8x32xf32>
    %33 = arith.addf %31, %32 : vector<8x32xf32>
    %34 = arith.negf %33 : vector<8x32xf32>
    %35 = math.exp %34 : vector<8x32xf32>
    %cst_17 = arith.constant 1.000000e+00 : f32
    %36 = vector.broadcast %cst_17 : f32 to vector<8x32xf32>
    %37 = arith.addf %36, %35 : vector<8x32xf32>
    %38 = arith.divf %36, %37 : vector<8x32xf32>
    %39 = arith.mulf %33, %38 : vector<8x32xf32>
    %40 = arith.truncf %39 : vector<8x32xf32> to vector<8x32xbf16>
    %c0_18 = arith.constant 0 : index
    %c0_19 = arith.constant 0 : index
    %41 = vector.load %arg7[%c0_18, %c0_19] : memref<32x32xbf16, #tpu.memory_space<vmem>>, vector<32x32xbf16>
    %cst_20 = arith.constant dense<0.000000e+00> : vector<8x32xf32>
    %42 = tpu.matmul %40, %41, %cst_20 {dimension_numbers = #tpu.dot_dimension_numbers<[1], [0], [0], [1], [0, 0, 1, 1], [], []>} : vector<8x32xbf16>, vector<32x32xbf16>, vector<8x32xf32> -> vector<8x32xf32>
    %c0_21 = arith.constant 0 : index
    %c0_22 = arith.constant 0 : index
    %43 = vector.load %arg8[%c0_21, %c0_22] : memref<1x32xf32, #tpu.memory_space<vmem>>, vector<1x32xf32>
    %44 = vector.broadcast %43 : vector<1x32xf32> to vector<8x32xf32>
    %45 = arith.addf %42, %44 : vector<8x32xf32>
    %c0_23 = arith.constant 0 : index
    %c0_24 = arith.constant 0 : index
    %c0_25 = arith.constant 0 : index
    %46 = vector.load %arg9[%c0_23, %c0_24, %c0_25] : memref<1x8x32xf32, #tpu.memory_space<vmem>>, vector<1x8x32xf32>
    %47 = vector.shape_cast %46 : vector<1x8x32xf32> to vector<8x32xf32>
    %48 = vector.shape_cast %45 : vector<8x32xf32> to vector<1x8x32xf32>
    tpu.vector_store %arg9[%c0_23, %c0_24, %c0_25], %48 {strides = array<i32>} : memref<1x8x32xf32, #tpu.memory_space<vmem>>, vector<1x8x32xf32>,
    return
  }
  func.func @transform_0(%arg0: i32, %arg1: i32) -> (i32, i32, i32) {
    %c0_i32 = arith.constant 0 : i32
    %c0_i32_0 = arith.constant 0 : i32
    %c0_i32_1 = arith.constant 0 : i32
    return %arg0, %c0_i32, %c0_i32_0 : i32, i32, i32
  }
  func.func @transform_1(%arg0: i32, %arg1: i32) -> (i32, i32, i32) {
    %c0_i32 = arith.constant 0 : i32
    %c0_i32_0 = arith.constant 0 : i32
    %c0_i32_1 = arith.constant 0 : i32
    return %arg0, %c0_i32, %c0_i32_0 : i32, i32, i32
  }
  func.func @transform_2(%arg0: i32, %arg1: i32) -> (i32, i32, i32) {
    %c0_i32 = arith.constant 0 : i32
    %c0_i32_0 = arith.constant 0 : i32
    return %arg0, %arg1, %c0_i32 : i32, i32, i32
  }
  func.func @transform_3(%arg0: i32, %arg1: i32) -> (i32, i32) {
    %c0_i32 = arith.constant 0 : i32
    %c0_i32_0 = arith.constant 0 : i32
    %c0_i32_1 = arith.constant 0 : i32
    return %c0_i32, %c0_i32_0 : i32, i32
  }
  func.func @transform_4(%arg0: i32, %arg1: i32) -> (i32, i32) {
    %c0_i32 = arith.constant 0 : i32
    %c0_i32_0 = arith.constant 0 : i32
    %c0_i32_1 = arith.constant 0 : i32
    return %c0_i32, %c0_i32_0 : i32, i32
  }
  func.func @transform_5(%arg0: i32, %arg1: i32) -> (i32, i32) {
    %c0_i32 = arith.constant 0 : i32
    %c0_i32_0 = arith.constant 0 : i32
    %c0_i32_1 = arith.constant 0 : i32
    return %c0_i32, %c0_i32_0 : i32, i32
  }
  func.func @transform_6(%arg0: i32, %arg1: i32) -> (i32, i32) {
    %c0_i32 = arith.constant 0 : i32
    %c0_i32_0 = arith.constant 0 : i32
    %c0_i32_1 = arith.constant 0 : i32
    return %c0_i32, %c0_i32_0 : i32, i32
  }
  func.func @transform_7(%arg0: i32, %arg1: i32) -> (i32, i32, i32) {
    %c0_i32 = arith.constant 0 : i32
    %c0_i32_0 = arith.constant 0 : i32
    return %arg0, %arg1, %c0_i32 : i32, i32, i32
  }
}

</mosaic_0001>

<llo_original>
// kernel: tpu_custom_call.1
$region0: #{tpu_custom_call.1}
  #allocation0 [shape = 'u32[]', space=smem, size = 0x4, offset = 0x4, fixed_abs, tag = 'smem constant byte address 0x4 - core index']
  #allocation1 [shape = 'u32[72,128]{1,0:T(1,128)}', space=vmem, size = 0x9000, scoped, tag = 'internal scratch']
  %s0 = inlined_call_operand.hbm [shape: f32[2,1,32], index: 0, kind: input, shape index: {}]
  %s1 = inlined_call_operand.hbm [shape: f32[2,1,32], index: 1, kind: input, shape index: {}]
  %s2 = inlined_call_operand.hbm [shape: f32[2,8,32], index: 2, kind: input, shape index: {}]
  %s3 = inlined_call_operand.vmem [shape: f32[1,32], index: 3, kind: input, shape index: {}]
  %s4 = inlined_call_operand.vmem [shape: f32[1,32], index: 4, kind: input, shape index: {}]
  %s5 = inlined_call_operand.hbm [shape: bf16[32,32], index: 5, kind: input, shape index: {}]
  %s6 = inlined_call_operand.vmem [shape: f32[1,32], index: 6, kind: input, shape index: {}]
  %s7 = inlined_call_operand.hbm [shape: f32[2,8,32], index: 7, kind: output, shape index: {}]
  %s8 = sld [smem:[#allocation0]]
  $region77: #{tpu_custom_call.1} parent=0
    _
  %s10 = ssub.s32 1, %s8
  %s11 = scalar_select 0, %s10, %s8
  $region1: #{tpu_custom_call.1} parent=0
    #allocation2 [shape = 'u8[1024]{0}', space=vmem, size = 0x400, scoped, tag = 'input window, operand 0']
    #allocation3 [shape = 's32[2]{0}', space=sflag, size = 0x8, scoped, tag = 'scoped memory for tpu_custom_call.1']
    #allocation4 [shape = 's32[2]{0}', space=sflag, size = 0x8, scoped, tag = 'scoped memory for tpu_custom_call.1']
    #allocation5 [shape = 'u8[1024]{0}', space=vmem, size = 0x400, scoped, tag = 'input window, operand 1']
    #allocation6 [shape = 's32[2]{0}', space=sflag, size = 0x8, scoped, tag = 'scoped memory for tpu_custom_call.1']
    #allocation7 [shape = 'u8[8192]{0}', space=vmem, size = 0x2000, scoped, tag = 'input window, operand 2']
    #allocation8 [shape = 'u8[8192]{0}', space=vmem, size = 0x2000, scoped, tag = 'input window, operand 5, single buffered']
    #allocation9 [shape = 's32[1]{0}', space=sflag, size = 0x4, scoped, tag = 'scoped memory for tpu_custom_call.1']
    #allocation10 [shape = 'u8[8192]{0}', space=vmem, size = 0x2000, scoped, tag = 'output window, operand 0']
    %12 = vsyncpa [#allocation3], 0
    %s13 = scalar_lea.sflag [#allocation3], 1
    %14 = vsyncpa %s13, 0
    %15 = vsyncpa [#allocation6], 0
    %s16 = scalar_lea.sflag [#allocation6], 1
    %17 = vsyncpa %s16, 0
    %18 = vsyncpa [#allocation9], 0
    %19 = vsyncpa [#allocation4], 0
    %s20 = scalar_lea.sflag [#allocation4], 1
    %21 = vsyncpa %s20, 0
    loop: start=0, step=1, limit=4
    $region2: #{tpu_custom_call.1} parent=1 // loop_pre_header
      _
    $region3: #{tpu_custom_call.1} parent=1 // loop_header
      %s23 = sphi 0, %s27
      %p24 = scmp.ge.s32.totalorder %s23, 4
      %s30 = sphi 0, %s42
      %s31 = sphi 0, %s38
      %s32 = sphi 0, %s30
      %s33 = sphi 0, %s31
      %s34 = sphi 0, %s32
      %s35 = sphi 0, %s33
      %s45 = sphi 0, %s47
      %s48 = sphi 0, %s45
      %s49 = sphi 0, %s48
      %s65 = sphi 0, %s49
      %s71 = sphi 0, %s73
      %s74 = sphi 0, %s71
      %s75 = sphi 0, %s74
      %s91 = sphi 0, %s75
      %s99 = sphi 0, %s101
      %s102 = sphi 0, %s99
      %s103 = sphi 0, %s102
      %s119 = sphi 0, %s103
      %s123 = sphi 0, %s123
      %s125 = sphi 0, %s123
      %s126 = sphi 0, %s125
      %s140 = sphi 0, %s126
      %s144 = sphi 0, %s144
      %s146 = sphi 0, %s144
      %s147 = sphi 0, %s146
      %s161 = sphi 0, %s147
      %s165 = sphi 0, %s165
      %s167 = sphi 0, %s165
      %s168 = sphi 0, %s167
      %s182 = sphi 0, %s168
      %s186 = sphi 0, %s186
      %s188 = sphi 0, %s186
      %s189 = sphi 0, %s188
      %s203 = sphi 0, %s189
      %s211 = sphi 0, %s213
      %s214 = sphi 0, %s211
      %s215 = sphi 0, %s214
      %s231 = sphi 0, %s215
    $region4: #{tpu_custom_call.1} parent=1 // loop_header_branch
      %26 = sbr.rel (%p24) target = $region8
    $region5: #{tpu_custom_call.1} parent=1 // loop_body
      %s28 = ssub.s32 %s23, 1
      %s29 = ssub.s32 %s23, 2
      %s36 = sadd.s32 1, %s31
      %p37 = scmp.ge.s32.totalorder %s36, 1
      %s38 = scalar_select %p37, 0, %s36
      %s39 = sadd.s32 1, %s30
      %s40 = scalar_select %p37, %s39, %s30
      %p41 = scmp.ge.s32.totalorder %s40, 2
      %s42 = scalar_select %p41, 0, %s40
      %s43 = ssub.s32 %s30, %s42
      %p44 = scmp.eq.s32.totalorder %s43, 0
      %s46 = sadd.s32 %s45, 1
      %s47 = scalar_select %p44, %s45, %s46
      %p50 = pneg %p44
      %p51 = scmp.eq.s32.totalorder %s23, 1
      %p52 = por %p50, %p51
      %p53 = scmp.ne.s32.totalorder %s45, %s48
      %p54 = scmp.eq.s32.totalorder %s23, 0
      %p55 = por %p53, %p54
      %p56 = scmp.ne.s32.totalorder %s45, %s48
      %p57 = scmp.eq.s32.totalorder %s28, 1
      %p58 = por %p56, %p57
      %p59 = scmp.ne.s32.totalorder %s48, %s49
      %p60 = scmp.eq.s32.totalorder %s28, 0
      %p61 = por %p59, %p60
      %p62 = scmp.ne.s32.totalorder %s48, %s49
      %p63 = scmp.eq.s32.totalorder %s29, 1
      %p64 = por %p62, %p63
      %p66 = scmp.ne.s32.totalorder %s49, %s65
      %p67 = scmp.eq.s32.totalorder %s29, 0
      %p68 = por %p66, %p67
      %s69 = ssub.s32 %s30, %s42
      %p70 = scmp.eq.s32.totalorder %s69, 0
      %s72 = sadd.s32 %s71, 1
      %s73 = scalar_select %p70, %s71, %s72
      %p76 = pneg %p70
      %p77 = scmp.eq.s32.totalorder %s23, 1
      %p78 = por %p76, %p77
      %p79 = scmp.ne.s32.totalorder %s71, %s74
      %p80 = scmp.eq.s32.totalorder %s23, 0
      %p81 = por %p79, %p80
      %p82 = scmp.ne.s32.totalorder %s71, %s74
      %p83 = scmp.eq.s32.totalorder %s28, 1
      %p84 = por %p82, %p83
      %p85 = scmp.ne.s32.totalorder %s74, %s75
      %p86 = scmp.eq.s32.totalorder %s28, 0
      %p87 = por %p85, %p86
      %p88 = scmp.ne.s32.totalorder %s74, %s75
      %p89 = scmp.eq.s32.totalorder %s29, 1
      %p90 = por %p88, %p89
      %p92 = scmp.ne.s32.totalorder %s75, %s91
      %p93 = scmp.eq.s32.totalorder %s29, 0
      %p94 = por %p92, %p93
      %s95 = ssub.s32 %s30, %s42
      %s96 = ssub.s32 %s31, %s38
      %s97 = sor.u32 %s95, %s96
      %p98 = scmp.eq.s32.totalorder %s97, 0
      %s100 = sadd.s32 %s99, 1
      %s101 = scalar_select %p98, %s99, %s100
      %p104 = pneg %p98
      %p105 = scmp.eq.s32.totalorder %s23, 1
      %p106 = por %p104, %p105
      %p107 = scmp.ne.s32.totalorder %s99, %s102
      %p108 = scmp.eq.s32.totalorder %s23, 0
      %p109 = por %p107, %p108
      %p110 = scmp.ne.s32.totalorder %s99, %s102
      %p111 = scmp.eq.s32.totalorder %s28, 1
      %p112 = por %p110, %p111
      %p113 = scmp.ne.s32.totalorder %s102, %s103
      %p114 = scmp.eq.s32.totalorder %s28, 0
      %p115 = por %p113, %p114
      %p116 = scmp.ne.s32.totalorder %s102, %s103
      %p117 = scmp.eq.s32.totalorder %s29, 1
      %p118 = por %p116, %p117
      %p120 = scmp.ne.s32.totalorder %s103, %s119
      %p121 = scmp.eq.s32.totalorder %s29, 0
      %p122 = por %p120, %p121
      %s124 = sadd.s32 %s123, 1
      %p127 = scmp.eq.s32.totalorder %s23, 1
      %p128 = scmp.ne.s32.totalorder %s123, %s125
      %p129 = scmp.eq.s32.totalorder %s23, 0
      %p130 = por %p128, %p129
      %p131 = scmp.ne.s32.totalorder %s123, %s125
      %p132 = scmp.eq.s32.totalorder %s28, 1
      %p133 = por %p131, %p132
      %p134 = scmp.ne.s32.totalorder %s125, %s126
      %p135 = scmp.eq.s32.totalorder %s28, 0
      %p136 = por %p134, %p135
      %p137 = scmp.ne.s32.totalorder %s125, %s126
      %p138 = scmp.eq.s32.totalorder %s29, 1
      %p139 = por %p137, %p138
      %p141 = scmp.ne.s32.totalorder %s126, %s140
      %p142 = scmp.eq.s32.totalorder %s29, 0
      %p143 = por %p141, %p142
      %s145 = sadd.s32 %s144, 1
      %p148 = scmp.eq.s32.totalorder %s23, 1
      %p149 = scmp.ne.s32.totalorder %s144, %s146
      %p150 = scmp.eq.s32.totalorder %s23, 0
      %p151 = por %p149, %p150
      %p152 = scmp.ne.s32.totalorder %s144, %s146
      %p153 = scmp.eq.s32.totalorder %s28, 1
      %p154 = por %p152, %p153
      %p155 = scmp.ne.s32.totalorder %s146, %s147
      %p156 = scmp.eq.s32.totalorder %s28, 0
      %p157 = por %p155, %p156
      %p158 = scmp.ne.s32.totalorder %s146, %s147
      %p159 = scmp.eq.s32.totalorder %s29, 1
      %p160 = por %p158, %p159
      %p162 = scmp.ne.s32.totalorder %s147, %s161
      %p163 = scmp.eq.s32.totalorder %s29, 0
      %p164 = por %p162, %p163
      %s166 = sadd.s32 %s165, 1
      %p169 = scmp.eq.s32.totalorder %s23, 1
      %p170 = scmp.ne.s32.totalorder %s165, %s167
      %p171 = scmp.eq.s32.totalorder %s23, 0
      %p172 = por %p170, %p171
      %p173 = scmp.ne.s32.totalorder %s165, %s167
      %p174 = scmp.eq.s32.totalorder %s28, 1
      %p175 = por %p173, %p174
      %p176 = scmp.ne.s32.totalorder %s167, %s168
      %p177 = scmp.eq.s32.totalorder %s28, 0
      %p178 = por %p176, %p177
      %p179 = scmp.ne.s32.totalorder %s167, %s168
      %p180 = scmp.eq.s32.totalorder %s29, 1
      %p181 = por %p179, %p180
      %p183 = scmp.ne.s32.totalorder %s168, %s182
      %p184 = scmp.eq.s32.totalorder %s29, 0
      %p185 = por %p183, %p184
      %s187 = sadd.s32 %s186, 1
      %p190 = scmp.eq.s32.totalorder %s23, 1
      %p191 = scmp.ne.s32.totalorder %s186, %s188
      %p192 = scmp.eq.s32.totalorder %s23, 0
      %p193 = por %p191, %p192
      %p194 = scmp.ne.s32.totalorder %s186, %s188
      %p195 = scmp.eq.s32.totalorder %s28, 1
      %p196 = por %p194, %p195
      %p197 = scmp.ne.s32.totalorder %s188, %s189
      %p198 = scmp.eq.s32.totalorder %s28, 0
      %p199 = por %p197, %p198
      %p200 = scmp.ne.s32.totalorder %s188, %s189
      %p201 = scmp.eq.s32.totalorder %s29, 1
      %p202 = por %p200, %p201
      %p204 = scmp.ne.s32.totalorder %s189, %s203
      %p205 = scmp.eq.s32.totalorder %s29, 0
      %p206 = por %p204, %p205
      %s207 = ssub.s32 %s30, %s42
      %s208 = ssub.s32 %s31, %s38
      %s209 = sor.u32 %s207, %s208
      %p210 = scmp.eq.s32.totalorder %s209, 0
      %s212 = sadd.s32 %s211, 1
      %s213 = scalar_select %p210, %s211, %s212
      %p216 = pneg %p210
      %p217 = scmp.eq.s32.totalorder %s23, 1
      %p218 = por %p216, %p217
      %p219 = scmp.ne.s32.totalorder %s211, %s214
      %p220 = scmp.eq.s32.totalorder %s23, 0
      %p221 = por %p219, %p220
      %p222 = scmp.ne.s32.totalorder %s211, %s214
      %p223 = scmp.eq.s32.totalorder %s28, 1
      %p224 = por %p222, %p223
      %p225 = scmp.ne.s32.totalorder %s214, %s215
      %p226 = scmp.eq.s32.totalorder %s28, 0
      %p227 = por %p225, %p226
      %p228 = scmp.ne.s32.totalorder %s214, %s215
      %p229 = scmp.eq.s32.totalorder %s29, 1
      %p230 = por %p228, %p229
      %p232 = scmp.ne.s32.totalorder %s215, %s231
      %p233 = scmp.eq.s32.totalorder %s29, 0
      %p234 = por %p232, %p233
      %p235 = scmp.le.s32.totalorder 1, %s23
      %p236 = scmp.lt.s32.totalorder %s23, 3
      %p237 = pnand %p235, %p236
      %p238 = pneg %p237
      // Predicated region
      $region9: #{tpu_custom_call.1} parent=5 // pred_check
        _
      $region10: #{tpu_custom_call.1} parent=5 // pred_check_branch
        %240 = sbr.rel (%p237) target = $region12
      $region11: #{tpu_custom_call.1} parent=5 // pred_region
        %s241 = ssub.s32 %s23, 1
        // Predicated region
        $region13: #{tpu_custom_call.1} parent=11 // pred_check
          %p242 = pneg %p136
        $region14: #{tpu_custom_call.1} parent=11 // pred_check_branch
          %244 = sbr.rel (%p242) target = $region16
        $region15: #{tpu_custom_call.1} parent=11 // pred_region
          _
        $region16: #{tpu_custom_call.1} parent=11 // pred_fallthru
          _
        // Predicated region
        $region17: #{tpu_custom_call.1} parent=11 // pred_check
          %p245 = pneg %p157
        $region18: #{tpu_custom_call.1} parent=11 // pred_check_branch
          %247 = sbr.rel (%p245) target = $region20
        $region19: #{tpu_custom_call.1} parent=11 // pred_region
          _
        $region20: #{tpu_custom_call.1} parent=11 // pred_fallthru
          _
        // Predicated region
        $region21: #{tpu_custom_call.1} parent=11 // pred_check
          %p248 = pneg %p178
        $region22: #{tpu_custom_call.1} parent=11 // pred_check_branch
          %250 = sbr.rel (%p248) target = $region24
        $region23: #{tpu_custom_call.1} parent=11 // pred_region
          %252 = vsyncadd [#allocation9], 0
          %s253 = sshll.u32 %s5, 4
          %s254 = int_to_ptr.hbm [resolvable:$true] %s253
          %s255 = sshll.u32 [#allocation8], 4
          %s256 = int_to_ptr.vmem [resolvable:$true] %s255
          %261 = dma.hbm_to_vmem [thread:$0]  %s254, 256, %s256, [#allocation9], 64, 64, 4
        $region24: #{tpu_custom_call.1} parent=11 // pred_fallthru
          _
        // Predicated region
        $region25: #{tpu_custom_call.1} parent=11 // pred_check
          %p262 = pneg %p199
        $region26: #{tpu_custom_call.1} parent=11 // pred_check_branch
          %264 = sbr.rel (%p262) target = $region28
        $region27: #{tpu_custom_call.1} parent=11 // pred_region
          _
        $region28: #{tpu_custom_call.1} parent=11 // pred_fallthru
          _
      $region12: #{tpu_custom_call.1} parent=5 // pred_fallthru
        _
      %p265 = scmp.lt.s32.totalorder %s23, 2
      // Predicated region
      $region29: #{tpu_custom_call.1} parent=5 // pred_check
        %p266 = pneg %p265
      $region30: #{tpu_custom_call.1} parent=5 // pred_check_branch
        %268 = sbr.rel (%p266) target = $region32
      $region31: #{tpu_custom_call.1} parent=5 // pred_region
        // Predicated region
        $region33: #{tpu_custom_call.1} parent=31 // pred_check
          %p269 = pneg %p55
        $region34: #{tpu_custom_call.1} parent=31 // pred_check_branch
          %271 = sbr.rel (%p269) target = $region36
        $region35: #{tpu_custom_call.1} parent=31 // pred_region
          %s272 = sand.u32 %s45, 1
          %s273 = scalar_lea.sflag [#allocation3], %s272
          %s274 = sand.u32 %s45, 1
          %s275 = scalar_lea.vmem [#allocation2], %s274
          %277 = vsyncadd %s273, 0
          %s278 = scalar_lea.hbm %s0, %s30
          %s280 = sshll.u32 %s278, 4
          %s281 = int_to_ptr.hbm [resolvable:$true] %s280
          %s282 = sshll.u32 %s275, 4
          %s283 = int_to_ptr.vmem [resolvable:$true] %s282
          %285 = dma.hbm_to_vmem [thread:$0]  %s281, 16, %s283, %s273
        $region36: #{tpu_custom_call.1} parent=31 // pred_fallthru
          _
        // Predicated region
        $region37: #{tpu_custom_call.1} parent=31 // pred_check
          %p286 = pneg %p81
        $region38: #{tpu_custom_call.1} parent=31 // pred_check_branch
          %288 = sbr.rel (%p286) target = $region40
        $region39: #{tpu_custom_call.1} parent=31 // pred_region
          %s289 = sand.u32 %s23, 1
          %s290 = scalar_lea.sflag [#allocation6], %s289
          %s291 = sand.u32 %s71, 1
          %s292 = scalar_lea.vmem [#allocation5], %s291
          %294 = vsyncadd %s290, 0
          %s295 = scalar_lea.hbm %s1, %s30
          %s297 = sshll.u32 %s295, 4
          %s298 = int_to_ptr.hbm [resolvable:$true] %s297
          %s299 = sshll.u32 %s292, 4
          %s300 = int_to_ptr.vmem [resolvable:$true] %s299
          %302 = dma.hbm_to_vmem [thread:$0]  %s298, 16, %s300, %s290
        $region40: #{tpu_custom_call.1} parent=31 // pred_fallthru
          _
        // Predicated region
        $region41: #{tpu_custom_call.1} parent=31 // pred_check
          %p303 = pneg %p109
        $region42: #{tpu_custom_call.1} parent=31 // pred_check_branch
          %305 = sbr.rel (%p303) target = $region44
        $region43: #{tpu_custom_call.1} parent=31 // pred_region
          %s306 = sand.u32 %s23, 1
          %s307 = scalar_lea.sflag [#allocation6], %s306
          %s308 = sand.u32 %s99, 1
          %s309 = smul.addr %s308, 8
          %s310 = scalar_lea.vmem [#allocation7], %s309
          %312 = vsyncadd %s307, 0
          %s313 = sadd.s32 %s31, %s30
          %s314 = smul.addr %s313, 8
          %s315 = scalar_lea.hbm %s2, %s314
          %s317 = sshll.u32 %s315, 4
          %s318 = int_to_ptr.hbm [resolvable:$true] %s317
          %s319 = sshll.u32 %s310, 4
          %s320 = int_to_ptr.vmem [resolvable:$true] %s319
          %322 = dma.hbm_to_vmem [thread:$0]  %s318, 128, %s320, %s307
        $region44: #{tpu_custom_call.1} parent=31 // pred_fallthru
          _
      $region32: #{tpu_custom_call.1} parent=5 // pred_fallthru
        _
      %p323 = scmp.le.s32.totalorder 1, %s23
      %p324 = scmp.lt.s32.totalorder %s23, 3
      %p325 = pnand %p323, %p324
      %p326 = pneg %p325
      // Predicated region
      $region45: #{tpu_custom_call.1} parent=5 // pred_check
        _
      $region46: #{tpu_custom_call.1} parent=5 // pred_check_branch
        %328 = sbr.rel (%p325) target = $region48
      $region47: #{tpu_custom_call.1} parent=5 // pred_region
        %s329 = ssub.s32 %s23, 1
        %s330 = sand.u32 %s48, 1
        %s331 = scalar_lea.sflag [#allocation3], %s330
        %s332 = sand.u32 %s48, 1
        %s333 = scalar_lea.vmem [#allocation2], %s332
        // Predicated region
        $region49: #{tpu_custom_call.1} parent=47 // pred_check
          %p334 = pneg %p61
        $region50: #{tpu_custom_call.1} parent=47 // pred_check_branch
          %336 = sbr.rel (%p334) target = $region52
        $region51: #{tpu_custom_call.1} parent=47 // pred_region
          %338 = dma.done %s331, 16
        $region52: #{tpu_custom_call.1} parent=47 // pred_fallthru
          _
        %s339 = sand.u32 %s28, 1
        %s340 = scalar_lea.sflag [#allocation6], %s339
        %s341 = sand.u32 %s74, 1
        %s342 = scalar_lea.vmem [#allocation5], %s341
        // Predicated region
        $region53: #{tpu_custom_call.1} parent=47 // pred_check
          %p343 = pneg %p87
        $region54: #{tpu_custom_call.1} parent=47 // pred_check_branch
          %345 = sbr.rel (%p343) target = $region56
        $region55: #{tpu_custom_call.1} parent=47 // pred_region
          %347 = dma.done %s340, 16
        $region56: #{tpu_custom_call.1} parent=47 // pred_fallthru
          _
        %s348 = sand.u32 %s28, 1
        %s349 = scalar_lea.sflag [#allocation6], %s348
        %s350 = sand.u32 %s102, 1
        %s351 = smul.addr %s350, 8
        %s352 = scalar_lea.vmem [#allocation7], %s351
        // Predicated region
        $region57: #{tpu_custom_call.1} parent=47 // pred_check
          %p353 = pneg %p115
        $region58: #{tpu_custom_call.1} parent=47 // pred_check_branch
          %355 = sbr.rel (%p353) target = $region60
        $region59: #{tpu_custom_call.1} parent=47 // pred_region
          %357 = dma.done %s349, 128
        $region60: #{tpu_custom_call.1} parent=47 // pred_fallthru
          _
        // Predicated region
        $region61: #{tpu_custom_call.1} parent=47 // pred_check
          %p358 = pneg %p178
        $region62: #{tpu_custom_call.1} parent=47 // pred_check_branch
          %360 = sbr.rel (%p358) target = $region64
        $region63: #{tpu_custom_call.1} parent=47 // pred_region
          %362 = dma.done [#allocation9], 256
        $region64: #{tpu_custom_call.1} parent=47 // pred_fallthru
          _
        %s363 = sand.u32 %s48, 1
        %s364 = scalar_lea.sflag [#allocation3], %s363
        %s365 = sand.u32 %s48, 1
        %s366 = scalar_lea.vmem [#allocation2], %s365
        %p367 = pneg %p61
        %p368 = pneg %p58
        %s369 = sand.u32 %s28, 1
        %s370 = scalar_lea.sflag [#allocation6], %s369
        %s371 = sand.u32 %s74, 1
        %s372 = scalar_lea.vmem [#allocation5], %s371
        %p373 = pneg %p87
        %p374 = pneg %p84
        %s375 = sand.u32 %s28, 1
        %s376 = scalar_lea.sflag [#allocation6], %s375
        %s377 = sand.u32 %s102, 1
        %s378 = smul.addr %s377, 8
        %s379 = scalar_lea.vmem [#allocation7], %s378
        %p380 = pneg %p115
        %p381 = pneg %p112
        %p382 = pneg %p136
        %p383 = pneg %p133
        %p384 = pneg %p157
        %p385 = pneg %p154
        %p386 = pneg %p178
        %p387 = pneg %p175
        %p388 = pneg %p199
        %p389 = pneg %p196
        %p390 = pneg %p227
        %p391 = pneg %p224
        %s392 = sand.u32 %s214, 1
        %s393 = scalar_lea.sflag [#allocation4], %s392
        %s394 = sand.u32 %s214, 1
        %s395 = smul.addr %s394, 8
        %s396 = scalar_lea.vmem [#allocation10], %s395
        %v398 = vld [vmem:[%s352] sm:$0xff]
        %vm399 = vcmask 261120
        %v400 = vsel %vm399, %v398, 0.0
        %401 = vadd.xlane.f32.xlu0 %v400
        %v402 = vpop.xlane.xlu0 %401
        %v403 = vrcp.pop 32.0
        %v404 = vmul.f32 32.0, %v403
        %v405 = vsub.f32 1.0, %v404
        %v406 = vmul.f32 %v403, %v405
        %v407 = vadd.f32 %v403, %v406
        %vm408 = vweird.f32 %v403
        %v409 = vsel %vm408, %v403, %v407
        %v410 = vmul.f32 %v402, %v409
        %v411 = vsub.f32 %v398, %v410
        %v412 = vmul.f32 %v411, %v411
        %v413 = vsel %vm399, %v412, 0.0
        %414 = vadd.xlane.f32.xlu0 %v413
        %v415 = vpop.xlane.xlu0 %414
        %v416 = vmul.f32 %v415, %v409
        %v417 = vadd.f32 %v416, 1e-05
        %v418 = vrsqrt.pop %v417
        %v419 = vmul.f32 %v418, %v417
        %v420 = vmul.f32 %v419, %v418
        %v421 = vmul.f32 0.5, %v420
        %v422 = vsub.f32 1.5, %v421
        %v423 = vmul.f32 %v418, %v422
        %vm424 = vweird.f32 %v417
        %vm425 = vweird.f32 %v418
        %vm426 = vmor %vm424, %vm425
        %v427 = vsel %vm426, %v418, %v423
        %v428 = vmul.f32 %v411, %v427
        %v429 = vld [vmem:[%s3] sm:$0x1]
        %v431 = vperm.slane %v429, 0
        %v433 = vmul.f32 %v428, %v431
        %v434 = vld [vmem:[%s4] sm:$0x1]
        %v436 = vperm.slane %v434, 0
        %v438 = vadd.f32 %v433, %v436
        %v439 = vld [vmem:[%s333] sm:$0x1]
        %v440 = vld [vmem:[%s342] sm:$0x1]
        %v441 = vadd.f32 %v439, 1.0
        %v443 = vperm.slane %v441, 0
        %v445 = vmul.f32 %v438, %v443
        %v447 = vperm.slane %v440, 0
        %v449 = vadd.f32 %v445, %v447
        %v450 = vxor.u32 %v449, 2147483648
        %v451 = vmul.f32 %v450, 1.442695
        %v452 = vpow.pop %v451
        %v453 = vadd.f32 %v452, 1.0
        %v454 = vrcp.pop %v453
        %v455 = vmul.f32 %v453, %v454
        %v456 = vsub.f32 1.0, %v455
        %v457 = vmul.f32 %v454, %v456
        %v458 = vadd.f32 %v454, %v457
        %vm459 = vweird.f32 %v453
        %vm460 = vweird.f32 %v454
        %vm461 = vmor %vm459, %vm460
        %v462 = vsel %vm461, %v454, %v458
        %v463 = vand.u32 2147483647, %v453
        %vm464 = vcmp.eq.f32.partialorder %v463, 8.507059e+37
        %v465 = vand.u32 %v453, 2147483648
        %v466 = vor.u32 1.1754944e-38, %v465
        %v467 = vsel %vm464, %v466, %v462
        %v468 = vmul.f32 1.0, %v467
        %v469 = vmul.f32 %v449, %v468
        %v470 = vpack.c.bf16 %v469, %v469
        %v471 = vld [vmem:[#allocation8] sm:$0xf]
        %v472 = vld [vmem:[#allocation8 + $0x4] sm:$0xf]
        %v473 = vld [vmem:[#allocation8 + $0x8] sm:$0xf]
        %v474 = vld [vmem:[#allocation8 + $0xc] sm:$0xf]
        %v475 = vld [vmem:[%s6] sm:$0x1]
        %v477 = vperm.slane %v475, 0
        %v483 = vunpack.c.l.b16 %v471
        %v484 = vunpack.c.l.b16 %v472
        %v485 = vunpack.c.l.b16 %v473
        %v486 = vunpack.c.l.b16 %v474
        %v487 = vpack.c.b16 %v484, %v483
        %v488 = vpack.c.b16 %v486, %v485
        %v492 = vsel %vm399, %v470, 0
        %494 = vmatpush.bf16.msra.mxu0 0
        %495 = vmatpush.bf16.msra.mxu0 0
        %496 = vmatpush.bf16.msra.mxu0 0
        %497 = vmatpush.bf16.msra.mxu0 0
        %498 = vmatpush.bf16.msra.mxu0 0
        %499 = vmatpush.bf16.msra.mxu0 0
        %500 = vmatpush.bf16.msra.mxu0 %v488
        %501 = vmatpush.bf16.msra.mxu0 %v487
        %502 = vmatmul.bf16.gmra.mxu0 %v492
        %v503 = vpop.f32.mrf.mxu0
        %v504 = vadd.f32 %v477, %v503
        %v505 = vpop.f32.mrf.mxu0
        %506 = vdwg.mxu0
        %507 = vst.msk [vmem:[%s396] sm:$0xff] %vm399, %v504
        %s508 = sand.u32 %s214, 1
        %s509 = scalar_lea.sflag [#allocation4], %s508
        %s510 = sand.u32 %s214, 1
        %s511 = smul.addr %s510, 8
        %s512 = scalar_lea.vmem [#allocation10], %s511
        // Predicated region
        $region65: #{tpu_custom_call.1} parent=47 // pred_check
          %p513 = pneg %p224
        $region66: #{tpu_custom_call.1} parent=47 // pred_check_branch
          %515 = sbr.rel (%p513) target = $region68
        $region67: #{tpu_custom_call.1} parent=47 // pred_region
          %517 = vsyncadd %s509, 0
          %s518 = sadd.s32 %s33, %s32
          %s519 = smul.addr %s518, 8
          %s520 = scalar_lea.hbm %s7, %s519
          %s522 = sshll.u32 %s512, 4
          %s523 = int_to_ptr.vmem [resolvable:$true] %s522
          %s524 = sshll.u32 %s520, 4
          %s525 = int_to_ptr.hbm [resolvable:$true] %s524
          %527 = dma.vmem_to_hbm [thread:$0]  %s523, 128, %s525, %s509
        $region68: #{tpu_custom_call.1} parent=47 // pred_fallthru
          _
      $region48: #{tpu_custom_call.1} parent=5 // pred_fallthru
        _
      %p528 = scmp.le.s32.totalorder 2, %s23
      // Predicated region
      $region69: #{tpu_custom_call.1} parent=5 // pred_check
        %p529 = pneg %p528
      $region70: #{tpu_custom_call.1} parent=5 // pred_check_branch
        %531 = sbr.rel (%p529) target = $region72
      $region71: #{tpu_custom_call.1} parent=5 // pred_region
        %s532 = ssub.s32 %s23, 2
        // Predicated region
        $region73: #{tpu_custom_call.1} parent=71 // pred_check
          %p533 = pneg %p230
        $region74: #{tpu_custom_call.1} parent=71 // pred_check_branch
          %535 = sbr.rel (%p533) target = $region76
        $region75: #{tpu_custom_call.1} parent=71 // pred_region
          %s536 = sand.u32 %s215, 1
          %s537 = scalar_lea.sflag [#allocation4], %s536
          %s538 = sand.u32 %s215, 1
          %s539 = smul.addr %s538, 8
          %s540 = scalar_lea.vmem [#allocation10], %s539
          %542 = dma.done %s537, 128
        $region76: #{tpu_custom_call.1} parent=71 // pred_fallthru
          _
      $region72: #{tpu_custom_call.1} parent=5 // pred_fallthru
        _
    $region6: #{tpu_custom_call.1} parent=1 // loop_footer
      %s27 = sadd.s32 1, %s23
    $region7: #{tpu_custom_call.1} parent=1 // loop_footer_branch
      %22 = sbr.rel target = $region3
    $region8: #{tpu_custom_call.1} parent=1 // loop_exit
      _
    %543 = vsyncpa [#allocation3], 1
    %s544 = scalar_lea.sflag [#allocation3], 1
    %545 = vsyncpa %s544, 1
    %546 = vsyncpa [#allocation6], 1
    %s547 = scalar_lea.sflag [#allocation6], 1
    %548 = vsyncpa %s547, 1
    %549 = vsyncpa [#allocation9], 1
    %550 = vsyncpa [#allocation4], 1
    %s551 = scalar_lea.sflag [#allocation4], 1
    %552 = vsyncpa %s551, 1

</llo_original>
